<compile_context>
chip_gen: v7x
topology: tpu7x:2x2x1
jax: 0.10.0
libtpu: 0.0.40
codegen_flags: <defaults>
</compile_context>

<pallas_src>
import jax
import jax.numpy as jnp
from jax.experimental import pallas as pl
from jax.experimental.pallas import tpu as pltpu

BN_EPS = 1e-5


def _round_up(v, m):
    return (v + m - 1) // m * m


def _vmem_need_bytes(thw, c_in, c_out):
    """Double-buffered per-step VMEM estimate (dominated by the pass-2 step)."""
    return (2 * c_in * thw * 4          # x block, f32, 2 buffers
            + 2 * c_out * thw * 2       # bf16 output block, 2 buffers
            + 2 * c_out * c_in * 2      # resident (scaled) bf16 weight, 2 buffers
            + 2 * c_in * c_in * 4       # pass-1 Gram accumulator block
            + 8 * (c_in + c_out) * 4)   # per-channel vectors + slack


def _pick_hw_tile(hw, c_in, c_out, max_tile=2048, budget=40 * 1024 * 1024):
    """Lane tile (multiple of 128) + padded H*W extent, VMEM/channel aware."""
    hw_r = _round_up(hw, 128)
    cap = min(max_tile, hw_r)

    def fits(t):
        return _vmem_need_bytes(t, c_in, c_out) <= budget

    # Largest multiple of 128 <= cap that fits the VMEM budget.
    t_best, t = 128, 128
    while t <= cap:
        if fits(t):
            t_best = t
        t += 128

    # Prefer an exact divisor of hw_r (zero padding) if it is within 2x of
    # the best VMEM-fitting tile; otherwise take the big tile and pad
    # (avoids the "HW = 128*prime collapses to thw=128" degenerate case).
    t_div, t = 128, 128
    while t <= t_best:
        if hw_r % t == 0 and fits(t):
            t_div = t
        t += 128
    thw = t_div if 2 * t_div >= t_best else t_best
    return thw, _round_up(hw_r, thw)


def _stats_kernel(x_ref, s_ref, g_ref):
    # x_ref: (C_in, thw) f32.  Per-image resident accumulators:
    #   s_ref: (C_in, 1)    f32  colsum(x)
    #   g_ref: (C_in, C_in) f32  Gram  x @ x^T
    @pl.when(pl.program_id(1) == 0)
    def _():
        s_ref[...] = jnp.zeros_like(s_ref)
        g_ref[...] = jnp.zeros_like(g_ref)

    xb = x_ref[...].astype(jnp.bfloat16)              # in-kernel cast for MXU
    s_ref[...] += jnp.sum(xb.astype(jnp.float32), axis=1, keepdims=True)
    # Contract the lane axis of both operands directly (no explicit transpose).
    g_ref[...] += jax.lax.dot_general(
        xb, xb, (((1,), (1,)), ((), ())), preferred_element_type=jnp.float32)


def _conv_bn_relu_kernel(x_ref, w_ref, shift_ref, o_ref):
    # The only real conv: (C_out,C_in) bf16 @ (C_in,thw) bf16 -> f32 acc.
    # BN scale is pre-folded into w_ref, so body is dot + shift + ReLU.
    xb = x_ref[...].astype(jnp.bfloat16)
    h = jnp.dot(w_ref[...], xb, preferred_element_type=jnp.float32)
    o_ref[...] = jnp.maximum(h + shift_ref[...], 0.0).astype(o_ref.dtype)


def conv_bn_relu_forward(x_nchw, conv_w, gamma, beta, eps=BN_EPS,
                         out_dtype=jnp.bfloat16):
    """x: (N, C_in, H, W), conv_w: (C_out, C_in, 1, 1) -> (N, C_out, H, W)."""
    N, C_in, H, W = x_nchw.shape
    C_out = conv_w.shape[0]
    assert conv_w.shape == (C_out, C_in, 1, 1), "only kernel_size=1 supported"

    HW = H * W
    thw, hw_pad = _pick_hw_tile(HW, C_in, C_out)
    T = hw_pad // thw
    need = _vmem_need_bytes(thw, C_in, C_out)
    vmem_limit = min(48 * 1024 * 1024,
                     max(need + 6 * 1024 * 1024, 8 * 1024 * 1024))

    # Free reshape (contiguous trailing dims); NO wrapper dtype cast of x.
    x = x_nchw.reshape(N, C_in, HW)
    if hw_pad != HW:
        # Zero padding is stats-safe: zero columns add nothing to colsum/Gram,
        # and padded outputs are sliced off below.
        x = jnp.pad(x, ((0, 0), (0, 0), (0, hw_pad - HW)))

    w_f32 = conv_w[:, :, 0, 0].astype(jnp.float32)        # (C_out, C_in)

    # ---- pass 1: per-image colsum(x) and Gram(x); no conv here ----
    s_n, g_n = pl.pallas_call(
        _stats_kernel,
        out_shape=(jax.ShapeDtypeStruct((N, C_in, 1), jnp.float32),
                   jax.ShapeDtypeStruct((N, C_in, C_in), jnp.float32)),
        grid=(N, T),
        in_specs=[pl.BlockSpec((None, C_in, thw), lambda n, t: (n, 0, t))],
        out_specs=(pl.BlockSpec((None, C_in, 1), lambda n, t: (n, 0, 0)),
                   pl.BlockSpec((None, C_in, C_in), lambda n, t: (n, 0, 0))),
        compiler_params=pltpu.CompilerParams(
            dimension_semantics=("parallel", "arbitrary"),
            vmem_limit_bytes=vmem_limit),
    )(x)

    # ---- tiny per-channel math outside the kernels (f32) ----
    m = jnp.float32(N * HW)                                # true count (no pad)
    s = jnp.sum(s_n, axis=0)                               # (C_in, 1)
    g = jnp.sum(g_n, axis=0)                               # (C_in, C_in)
    mean = (w_f32 @ s) / m                                 # (C_out, 1)
    e_h2 = jnp.sum((w_f32 @ g) * w_f32, axis=1, keepdims=True) / m
    # TODO(synk): E[h^2]-E[h]^2 can cancel when |mean| >> std; switch to a
    #             shifted / two-level accumulation if that regime matters.
    var = jnp.maximum(e_h2 - mean * mean, 0.0)
    scale = gamma.reshape(C_out, 1).astype(jnp.float32) * jax.lax.rsqrt(var + eps)
    shift = beta.reshape(C_out, 1).astype(jnp.float32) - mean * scale
    w_scaled = (scale * w_f32).astype(jnp.bfloat16)        # fold BN scale into W

    # ---- pass 2: the single conv + shift + ReLU, lane-dense bf16 stores ----
    y = pl.pallas_call(
        _conv_bn_relu_kernel,
        out_shape=jax.ShapeDtypeStruct((N, C_out, hw_pad), out_dtype),
        grid=(N, T),
        in_specs=[
            pl.BlockSpec((None, C_in, thw), lambda n, t: (n, 0, t)),
            pl.BlockSpec((C_out, C_in), lambda n, t: (0, 0)),
            pl.BlockSpec((C_out, 1), lambda n, t: (0, 0)),
        ],
        out_specs=pl.BlockSpec((None, C_out, thw), lambda n, t: (n, 0, t)),
        compiler_params=pltpu.CompilerParams(
            dimension_semantics=("parallel", "parallel"),
            vmem_limit_bytes=vmem_limit),
    )(x, w_scaled, shift)

    if hw_pad != HW:
        y = y[:, :, :HW]
    return y.reshape(N, C_out, H, W)


def _reference(x, conv_w, gamma, beta, eps=BN_EPS):
    # Pure-JAX f32 reference of the PyTorch forward (training-mode BN).
    h = jnp.einsum("nchw,oc->nohw", x, conv_w[:, :, 0, 0])
    mean = jnp.mean(h, axis=(0, 2, 3), keepdims=True)
    var = jnp.mean((h - mean) ** 2, axis=(0, 2, 3), keepdims=True)
    h = (h - mean) * jax.lax.rsqrt(var + eps)
    h = h * gamma[None, :, None, None] + beta[None, :, None, None]
    return jnp.maximum(h, 0.0)


if __name__ == "__main__":
    N, C_in, C_out, H, W = 2, 4, 8, 16, 16

    key = jax.random.PRNGKey(0)
    kw, kg, kb, kx = jax.random.split(key, 4)

    bound = 1.0 / (C_in ** 0.5)
    conv_w = jax.random.uniform(kw, (C_out, C_in, 1, 1), jnp.float32, -bound, bound)
    gamma = jax.random.uniform(kg, (C_out,), jnp.float32, 0.5, 1.5)
    beta = jax.random.uniform(kb, (C_out,), jnp.float32, -0.5, 0.5)
    x = jax.random.normal(kx, (N, C_in, H, W), jnp.float32)

    out = conv_bn_relu_forward(x, conv_w, gamma, beta)
    out = jax.block_until_ready(out)

    ref = _reference(x, conv_w, gamma, beta)
    assert out.shape == (N, C_out, H, W)
    # bf16 MXU operands + bf16 output -> slightly looser tolerance than f32.
    assert jnp.allclose(out.astype(jnp.float32), ref, atol=5e-2, rtol=5e-2)

    print("KERNEL_OK")
</pallas_src>

<mosaic_0001>
module attributes {stable_mosaic.version = 11 : i64} {
  func.func @_stats_kernel(%arg0: i32, %arg1: i32, %arg2: memref<1x4x256xf32, #tpu.memory_space<vmem>>, %arg3: memref<1x4x1xf32, #tpu.memory_space<vmem>>, %arg4: memref<1x4x4xf32, #tpu.memory_space<vmem>>) attributes {dimension_semantics = [#tpu.dimension_semantics<parallel>, #tpu.dimension_semantics<arbitrary>], iteration_bounds = array<i64: 2, 1>, scalar_prefetch = 0 : i64, scratch_operands = 0 : i64, tpu.core_type = #tpu.core_type<tc>, window_params = [{transform_indices = @transform_0, window_bounds = array<i64: 1, 4, 256>}, {transform_indices = @transform_1, window_bounds = array<i64: 1, 4, 1>}, {transform_indices = @transform_2, window_bounds = array<i64: 1, 4, 4>}]} {
    %c0_i32 = arith.constant 0 : i32
    %0 = arith.cmpi eq, %arg1, %c0_i32 : i32
    %1 = arith.extui %0 : i1 to i32
    %c0_i32_0 = arith.constant 0 : i32
    %2 = arith.cmpi ne, %1, %c0_i32_0 : i32
    scf.if %2 {
      %cst_16 = arith.constant 0.000000e+00 : f32
      %22 = vector.broadcast %cst_16 : f32 to vector<4x1xf32>
      %c0_17 = arith.constant 0 : index
      %c0_18 = arith.constant 0 : index
      %c0_19 = arith.constant 0 : index
      %23 = vector.load %arg3[%c0_17, %c0_18, %c0_19] : memref<1x4x1xf32, #tpu.memory_space<vmem>>, vector<1x4x1xf32>
      %24 = vector.shape_cast %23 : vector<1x4x1xf32> to vector<4x1xf32>
      %25 = vector.shape_cast %22 : vector<4x1xf32> to vector<1x4x1xf32>
      tpu.vector_store %arg3[%c0_17, %c0_18, %c0_19], %25 {strides = array<i32>} : memref<1x4x1xf32, #tpu.memory_space<vmem>>, vector<1x4x1xf32>,
      %cst_20 = arith.constant 0.000000e+00 : f32
      %26 = vector.broadcast %cst_20 : f32 to vector<4x4xf32>
      %c0_21 = arith.constant 0 : index
      %c0_22 = arith.constant 0 : index
      %c0_23 = arith.constant 0 : index
      %27 = vector.load %arg4[%c0_21, %c0_22, %c0_23] : memref<1x4x4xf32, #tpu.memory_space<vmem>>, vector<1x4x4xf32>
      %28 = vector.shape_cast %27 : vector<1x4x4xf32> to vector<4x4xf32>
      %29 = vector.shape_cast %26 : vector<4x4xf32> to vector<1x4x4xf32>
      tpu.vector_store %arg4[%c0_21, %c0_22, %c0_23], %29 {strides = array<i32>} : memref<1x4x4xf32, #tpu.memory_space<vmem>>, vector<1x4x4xf32>,
    } else {
    }
    %c0 = arith.constant 0 : index
    %c0_1 = arith.constant 0 : index
    %c0_2 = arith.constant 0 : index
    %3 = vector.load %arg2[%c0, %c0_1, %c0_2] : memref<1x4x256xf32, #tpu.memory_space<vmem>>, vector<1x4x256xf32>
    %4 = vector.shape_cast %3 : vector<1x4x256xf32> to vector<4x256xf32>
    %5 = arith.truncf %4 : vector<4x256xf32> to vector<4x256xbf16>
    %c0_3 = arith.constant 0 : index
    %c0_4 = arith.constant 0 : index
    %c0_5 = arith.constant 0 : index
    %6 = vector.load %arg3[%c0_3, %c0_4, %c0_5] : memref<1x4x1xf32, #tpu.memory_space<vmem>>, vector<1x4x1xf32>
    %7 = vector.shape_cast %6 : vector<1x4x1xf32> to vector<4x1xf32>
    %8 = arith.extf %5 : vector<4x256xbf16> to vector<4x256xf32>
    %cst = arith.constant dense<0.000000e+00> : vector<4xf32>
    %9 = vector.multi_reduction <add>, %8, %cst [1] : vector<4x256xf32> to vector<4xf32>
    %10 = vector.shape_cast %9 : vector<4xf32> to vector<4x1xf32>
    %11 = arith.addf %7, %10 : vector<4x1xf32>
    %c0_6 = arith.constant 0 : index
    %c0_7 = arith.constant 0 : index
    %c0_8 = arith.constant 0 : index
    %12 = vector.load %arg3[%c0_6, %c0_7, %c0_8] : memref<1x4x1xf32, #tpu.memory_space<vmem>>, vector<1x4x1xf32>
    %13 = vector.shape_cast %12 : vector<1x4x1xf32> to vector<4x1xf32>
    %14 = vector.shape_cast %11 : vector<4x1xf32> to vector<1x4x1xf32>
    tpu.vector_store %arg3[%c0_6, %c0_7, %c0_8], %14 {strides = array<i32>} : memref<1x4x1xf32, #tpu.memory_space<vmem>>, vector<1x4x1xf32>,
    %c0_9 = arith.constant 0 : index
    %c0_10 = arith.constant 0 : index
    %c0_11 = arith.constant 0 : index
    %15 = vector.load %arg4[%c0_9, %c0_10, %c0_11] : memref<1x4x4xf32, #tpu.memory_space<vmem>>, vector<1x4x4xf32>
    %16 = vector.shape_cast %15 : vector<1x4x4xf32> to vector<4x4xf32>
    %cst_12 = arith.constant dense<0.000000e+00> : vector<4x4xf32>
    %17 = tpu.matmul %5, %5, %cst_12 {dimension_numbers = #tpu.dot_dimension_numbers<[1], [1], [0], [0], [0, 0, 1, 0], [], []>} : vector<4x256xbf16>, vector<4x256xbf16>, vector<4x4xf32> -> vector<4x4xf32>
    %18 = arith.addf %16, %17 : vector<4x4xf32>
    %c0_13 = arith.constant 0 : index
    %c0_14 = arith.constant 0 : index
    %c0_15 = arith.constant 0 : index
    %19 = vector.load %arg4[%c0_13, %c0_14, %c0_15] : memref<1x4x4xf32, #tpu.memory_space<vmem>>, vector<1x4x4xf32>
    %20 = vector.shape_cast %19 : vector<1x4x4xf32> to vector<4x4xf32>
    %21 = vector.shape_cast %18 : vector<4x4xf32> to vector<1x4x4xf32>
    tpu.vector_store %arg4[%c0_13, %c0_14, %c0_15], %21 {strides = array<i32>} : memref<1x4x4xf32, #tpu.memory_space<vmem>>, vector<1x4x4xf32>,
    return
  }
  func.func @transform_0(%arg0: i32, %arg1: i32) -> (i32, i32, i32) {
    %c0_i32 = arith.constant 0 : i32
    %c0_i32_0 = arith.constant 0 : i32
    return %arg0, %c0_i32, %arg1 : i32, i32, i32
  }
  func.func @transform_1(%arg0: i32, %arg1: i32) -> (i32, i32, i32) {
    %c0_i32 = arith.constant 0 : i32
    %c0_i32_0 = arith.constant 0 : i32
    %c0_i32_1 = arith.constant 0 : i32
    return %arg0, %c0_i32, %c0_i32_0 : i32, i32, i32
  }
  func.func @transform_2(%arg0: i32, %arg1: i32) -> (i32, i32, i32) {
    %c0_i32 = arith.constant 0 : i32
    %c0_i32_0 = arith.constant 0 : i32
    %c0_i32_1 = arith.constant 0 : i32
    return %arg0, %c0_i32, %c0_i32_0 : i32, i32, i32
  }
}

</mosaic_0001>

<llo_original>
// kernel: tpu_custom_call.1
$region0: #{tpu_custom_call.1}
  #allocation0 [shape = 'u32[]', space=smem, size = 0x4, offset = 0x4, fixed_abs, tag = 'smem constant byte address 0x4 - core index']
  #allocation1 [shape = 'u32[144,128]{1,0:T(1,128)}', space=vmem, size = 0x12000, scoped, tag = 'internal scratch']
  %s0 = inlined_call_operand.hbm [shape: f32[2,4,256], index: 0, kind: input, shape index: {}]
  %s1 = inlined_call_operand.vmem [shape: f32[2,4,1], index: 1, kind: output, shape index: {0}]
  %s2 = inlined_call_operand.hbm [shape: f32[2,4,4], index: 2, kind: output, shape index: {1}]
  %3 = xla_tuple %s1, %s2
  %s4 = sld [smem:[#allocation0]]
  $region53: #{tpu_custom_call.1} parent=0
    _
  %s6 = ssub.s32 1, %s4
  %s7 = scalar_select 0, %s6, %s4
  $region1: #{tpu_custom_call.1} parent=0
    #allocation2 [shape = 'u8[8192]{0}', space=vmem, size = 0x2000, scoped, tag = 'input window, operand 0']
    #allocation3 [shape = 's32[2]{0}', space=sflag, size = 0x8, scoped, tag = 'scoped memory for tpu_custom_call.1']
    #allocation4 [shape = 's32[2]{0}', space=sflag, size = 0x8, scoped, tag = 'scoped memory for tpu_custom_call.1']
    #allocation5 [shape = 'u8[4096]{0}', space=vmem, size = 0x1000, scoped, tag = 'output window, operand 1']
    %8 = vsyncpa [#allocation3], 0
    %s9 = scalar_lea.sflag [#allocation3], 1
    %10 = vsyncpa %s9, 0
    %11 = vsyncpa [#allocation4], 0
    %s12 = scalar_lea.sflag [#allocation4], 1
    %13 = vsyncpa %s12, 0
    loop: start=0, step=1, limit=4
    $region2: #{tpu_custom_call.1} parent=1 // loop_pre_header
      _
    $region3: #{tpu_custom_call.1} parent=1 // loop_header
      %s15 = sphi 0, %s19
      %p16 = scmp.ge.s32.totalorder %s15, 4
      %s22 = sphi 0, %s34
      %s23 = sphi 0, %s30
      %s24 = sphi 0, %s22
      %s25 = sphi 0, %s23
      %s26 = sphi 0, %s24
      %s27 = sphi 0, %s25
      %s39 = sphi 0, %s41
      %s42 = sphi 0, %s39
      %s43 = sphi 0, %s42
      %s59 = sphi 0, %s43
      %s65 = sphi 0, %s67
      %s68 = sphi 0, %s65
      %s69 = sphi 0, %s68
      %s85 = sphi 0, %s69
      %s91 = sphi 0, %s93
      %s94 = sphi 0, %s91
      %s95 = sphi 0, %s94
      %s111 = sphi 0, %s95
    $region4: #{tpu_custom_call.1} parent=1 // loop_header_branch
      %18 = sbr.rel (%p16) target = $region8
    $region5: #{tpu_custom_call.1} parent=1 // loop_body
      %s20 = ssub.s32 %s15, 1
      %s21 = ssub.s32 %s15, 2
      %s28 = sadd.s32 1, %s23
      %p29 = scmp.ge.s32.totalorder %s28, 1
      %s30 = scalar_select %p29, 0, %s28
      %s31 = sadd.s32 1, %s22
      %s32 = scalar_select %p29, %s31, %s22
      %p33 = scmp.ge.s32.totalorder %s32, 2
      %s34 = scalar_select %p33, 0, %s32
      %s35 = ssub.s32 %s22, %s34
      %s36 = ssub.s32 %s23, %s30
      %s37 = sor.u32 %s35, %s36
      %p38 = scmp.eq.s32.totalorder %s37, 0
      %s40 = sadd.s32 %s39, 1
      %s41 = scalar_select %p38, %s39, %s40
      %p44 = pneg %p38
      %p45 = scmp.eq.s32.totalorder %s15, 1
      %p46 = por %p44, %p45
      %p47 = scmp.ne.s32.totalorder %s39, %s42
      %p48 = scmp.eq.s32.totalorder %s15, 0
      %p49 = por %p47, %p48
      %p50 = scmp.ne.s32.totalorder %s39, %s42
      %p51 = scmp.eq.s32.totalorder %s20, 1
      %p52 = por %p50, %p51
      %p53 = scmp.ne.s32.totalorder %s42, %s43
      %p54 = scmp.eq.s32.totalorder %s20, 0
      %p55 = por %p53, %p54
      %p56 = scmp.ne.s32.totalorder %s42, %s43
      %p57 = scmp.eq.s32.totalorder %s21, 1
      %p58 = por %p56, %p57
      %p60 = scmp.ne.s32.totalorder %s43, %s59
      %p61 = scmp.eq.s32.totalorder %s21, 0
      %p62 = por %p60, %p61
      %s63 = ssub.s32 %s22, %s34
      %p64 = scmp.eq.s32.totalorder %s63, 0
      %s66 = sadd.s32 %s65, 1
      %s67 = scalar_select %p64, %s65, %s66
      %p70 = pneg %p64
      %p71 = scmp.eq.s32.totalorder %s15, 1
      %p72 = por %p70, %p71
      %p73 = scmp.ne.s32.totalorder %s65, %s68
      %p74 = scmp.eq.s32.totalorder %s15, 0
      %p75 = por %p73, %p74
      %p76 = scmp.ne.s32.totalorder %s65, %s68
      %p77 = scmp.eq.s32.totalorder %s20, 1
      %p78 = por %p76, %p77
      %p79 = scmp.ne.s32.totalorder %s68, %s69
      %p80 = scmp.eq.s32.totalorder %s20, 0
      %p81 = por %p79, %p80
      %p82 = scmp.ne.s32.totalorder %s68, %s69
      %p83 = scmp.eq.s32.totalorder %s21, 1
      %p84 = por %p82, %p83
      %p86 = scmp.ne.s32.totalorder %s69, %s85
      %p87 = scmp.eq.s32.totalorder %s21, 0
      %p88 = por %p86, %p87
      %s89 = ssub.s32 %s22, %s34
      %p90 = scmp.eq.s32.totalorder %s89, 0
      %s92 = sadd.s32 %s91, 1
      %s93 = scalar_select %p90, %s91, %s92
      %p96 = pneg %p90
      %p97 = scmp.eq.s32.totalorder %s15, 1
      %p98 = por %p96, %p97
      %p99 = scmp.ne.s32.totalorder %s91, %s94
      %p100 = scmp.eq.s32.totalorder %s15, 0
      %p101 = por %p99, %p100
      %p102 = scmp.ne.s32.totalorder %s91, %s94
      %p103 = scmp.eq.s32.totalorder %s20, 1
      %p104 = por %p102, %p103
      %p105 = scmp.ne.s32.totalorder %s94, %s95
      %p106 = scmp.eq.s32.totalorder %s20, 0
      %p107 = por %p105, %p106
      %p108 = scmp.ne.s32.totalorder %s94, %s95
      %p109 = scmp.eq.s32.totalorder %s21, 1
      %p110 = por %p108, %p109
      %p112 = scmp.ne.s32.totalorder %s95, %s111
      %p113 = scmp.eq.s32.totalorder %s21, 0
      %p114 = por %p112, %p113
      %p115 = scmp.le.s32.totalorder 1, %s15
      %p116 = scmp.lt.s32.totalorder %s15, 3
      %p117 = pnand %p115, %p116
      %p118 = pneg %p117
      // Predicated region
      $region9: #{tpu_custom_call.1} parent=5 // pred_check
        _
      $region10: #{tpu_custom_call.1} parent=5 // pred_check_branch
        %120 = sbr.rel (%p117) target = $region12
      $region11: #{tpu_custom_call.1} parent=5 // pred_region
        %s121 = ssub.s32 %s15, 1
      $region12: #{tpu_custom_call.1} parent=5 // pred_fallthru
        _
      %p122 = scmp.lt.s32.totalorder %s15, 2
      // Predicated region
      $region13: #{tpu_custom_call.1} parent=5 // pred_check
        %p123 = pneg %p122
      $region14: #{tpu_custom_call.1} parent=5 // pred_check_branch
        %125 = sbr.rel (%p123) target = $region16
      $region15: #{tpu_custom_call.1} parent=5 // pred_region
        // Predicated region
        $region17: #{tpu_custom_call.1} parent=15 // pred_check
          %p126 = pneg %p49
        $region18: #{tpu_custom_call.1} parent=15 // pred_check_branch
          %128 = sbr.rel (%p126) target = $region20
        $region19: #{tpu_custom_call.1} parent=15 // pred_region
          %s129 = sand.u32 %s39, 1
          %s130 = scalar_lea.sflag [#allocation3], %s129
          %s131 = sand.u32 %s39, 1
          %s132 = smul.addr %s131, 8
          %s133 = scalar_lea.vmem [#allocation2], %s132
          %s134 = smul.u32 2, %s23
          %s136 = ssub.s32 128, 128
          %137 = vsyncadd %s130, %s136
          %s138 = smul.addr %s22, 2
          %s139 = sadd.s32 %s134, %s138
          %s140 = smul.addr %s139, 64
          %s141 = scalar_lea.hbm %s0, %s140
          %s143 = sshll.u32 %s133, 4
          %s144 = int_to_ptr.vmem [resolvable:$true] %s143
          %146 = dma.hbm_to_vmem [thread:$0]  %s141, 128, %s144, %s130
        $region20: #{tpu_custom_call.1} parent=15 // pred_fallthru
          _
      $region16: #{tpu_custom_call.1} parent=5 // pred_fallthru
        _
      %p147 = scmp.le.s32.totalorder 1, %s15
      %p148 = scmp.lt.s32.totalorder %s15, 3
      %p149 = pnand %p147, %p148
      %p150 = pneg %p149
      // Predicated region
      $region21: #{tpu_custom_call.1} parent=5 // pred_check
        _
      $region22: #{tpu_custom_call.1} parent=5 // pred_check_branch
        %152 = sbr.rel (%p149) target = $region24
      $region23: #{tpu_custom_call.1} parent=5 // pred_region
        %s153 = ssub.s32 %s15, 1
        %s154 = sand.u32 %s42, 1
        %s155 = scalar_lea.sflag [#allocation3], %s154
        %s156 = sand.u32 %s42, 1
        %s157 = smul.addr %s156, 8
        %s158 = scalar_lea.vmem [#allocation2], %s157
        // Predicated region
        $region25: #{tpu_custom_call.1} parent=23 // pred_check
          %p159 = pneg %p55
        $region26: #{tpu_custom_call.1} parent=23 // pred_check_branch
          %161 = sbr.rel (%p159) target = $region28
        $region27: #{tpu_custom_call.1} parent=23 // pred_region
          %162 = dma.done %s155, 128
        $region28: #{tpu_custom_call.1} parent=23 // pred_fallthru
          _
        %s163 = sand.u32 %s42, 1
        %s164 = scalar_lea.sflag [#allocation3], %s163
        %s165 = sand.u32 %s42, 1
        %s166 = smul.addr %s165, 8
        %s167 = scalar_lea.vmem [#allocation2], %s166
        %p168 = pneg %p55
        %p169 = pneg %p52
        %p170 = pneg %p81
        %p171 = pneg %p78
        %p172 = scmp.lt.s32.totalorder %s24, 1
        %s173 = scalar_select %p172, %s24, 1
        %s174 = smul.addr %s173, 4
        %s175 = scalar_lea.vmem %s1, %s174
        %p176 = pneg %p107
        %p177 = pneg %p104
        %s178 = sand.u32 %s94, 1
        %s179 = scalar_lea.sflag [#allocation4], %s178
        %s180 = sand.u32 %s94, 1
        %s181 = smul.addr %s180, 4
        %s182 = scalar_lea.vmem [#allocation5], %s181
        %s183 = smul.u32 2, %s25
        %p184 = scmp.lt.s32.totalorder %s24, 1
        %s185 = scalar_select %p184, %s24, 1
        %s186 = smul.addr %s185, 4
        %s187 = scalar_lea.vmem %s1, %s186
        %p189 = scmp.eq.s32.totalorder %s25, 0
        // Predicated region
        $region29: #{tpu_custom_call.1} parent=23 // pred_check
          %p190 = pneg %p189
        $region30: #{tpu_custom_call.1} parent=23 // pred_check_branch
          %192 = sbr.rel (%p190) target = $region32
        $region31: #{tpu_custom_call.1} parent=23 // pred_region
          %vm193 = vcmask 3072
          %194 = vst.msk [vmem:[%s187] sm:$0xf] %vm193, 0.0
          %vm195 = vcmask 27648
          %196 = vst.msk [vmem:[%s182] sm:$0xf] %vm195, 0.0
        $region32: #{tpu_custom_call.1} parent=23 // pred_fallthru
          _
        %v197 = vld [vmem:[%s158] sm:$0xff]
        %v199 = vcombine.high %v197, %v197
        %v201 = vpack.c.bf16 %v197, %v197
        %v202 = vpack.c.bf16 %v199, %v199
        %v203 = vld [vmem:[%s187] sm:$0xf]
        %v204 = vunpack.c.l.bf16 %v201
        %v205 = vunpack.c.l.bf16 %v202
        %vm206 = vcmask 1043456
        %v207 = vsel %vm206, %v204, 0.0
        %v208 = vsel %vm206, %v205, 0.0
        %v209 = vadd.f32 %v207, %v208
        %210 = vadd.xlane.f32.xlu0 %v209
        %v211 = vpop.xlane.xlu0 %210
        %v212 = vadd.f32 %v203, %v211
        %vm213 = vcmask 3072
        %214 = vst.msk [vmem:[%s187] sm:$0xf] %vm213, %v212
        %v215 = vld [vmem:[%s182] sm:$0xf]
        %216 = vmatprep.subr.bf16.mxu0 %v202
        %217 = vmatpush1.bf16.xpose.msra.mxu0 %v201
        %218 = vmatprep.subr.bf16.mxu0 0
        %219 = vmatpush1.bf16.xpose.msra.mxu0 0
        %220 = vmatprep.subr.bf16.mxu0 0
        %221 = vmatpush1.bf16.xpose.msra.mxu0 0
        %222 = vmatprep.subr.bf16.mxu0 0
        %223 = vmatpush1.bf16.xpose.msra.mxu0 0
        %224 = vmatprep.subr.bf16.mxu0 0
        %225 = vmatpush1.bf16.xpose.msra.mxu0 0
        %226 = vmatprep.subr.bf16.mxu0 0
        %227 = vmatpush1.bf16.xpose.msra.mxu0 0
        %228 = vmatprep.subr.bf16.mxu0 0
        %229 = vmatpush1.bf16.xpose.msra.mxu0 0
        %230 = vmatprep.subr.bf16.mxu0 0
        %231 = vmatpush1.bf16.xpose.msra.mxu0 0
        %232 = vmatprep.subr.bf16.mxu0 0
        %233 = vmatpush1.bf16.xpose.msra.mxu0 0
        %234 = vmatprep.subr.bf16.mxu0 0
        %235 = vmatpush1.bf16.xpose.msra.mxu0 0
        %236 = vmatprep.subr.bf16.mxu0 0
        %237 = vmatpush1.bf16.xpose.msra.mxu0 0
        %238 = vmatprep.subr.bf16.mxu0 0
        %239 = vmatpush1.bf16.xpose.msra.mxu0 0
        %240 = vmatprep.subr.bf16.mxu0 0
        %241 = vmatpush1.bf16.xpose.msra.mxu0 0
        %242 = vmatprep.subr.bf16.mxu0 0
        %243 = vmatpush1.bf16.xpose.msra.mxu0 0
        %244 = vmatprep.subr.bf16.mxu0 0
        %245 = vmatpush1.bf16.xpose.msra.mxu0 0
        %246 = vmatprep.subr.bf16.mxu0 0
        %247 = vmatpush1.bf16.xpose.msra.mxu0 0
        %248 = vmatprep.mubr.bf16.mxu0 %v202
        %249 = vmatmul.mubr.bf16.gmra.mrb[0].mxu0 %v201
        %v250 = vpop.f32.mrb[0].mxu0
        %v251 = vadd.f32 0.0, %v250
        %v252 = vpop.f32.mrb[0].mxu0
        %v253 = vpop.f32.mrb[0].mxu0
        %v254 = vpop.f32.mrb[0].mxu0
        %255 = vdwg.mxu0
        %v256 = vadd.f32 %v215, %v251
        %vm257 = vcmask 27648
        %258 = vst.msk [vmem:[%s182] sm:$0xf] %vm257, %v256
        %p259 = scmp.lt.s32.totalorder %s24, 1
        %s260 = scalar_select %p259, %s24, 1
        %s261 = smul.addr %s260, 4
        %s262 = scalar_lea.vmem %s1, %s261
        %s263 = sand.u32 %s94, 1
        %s264 = scalar_lea.sflag [#allocation4], %s263
        %s265 = sand.u32 %s94, 1
        %s266 = smul.addr %s265, 4
        %s267 = scalar_lea.vmem [#allocation5], %s266
        // Predicated region
        $region33: #{tpu_custom_call.1} parent=23 // pred_check
          %p268 = pneg %p78
        $region34: #{tpu_custom_call.1} parent=23 // pred_check_branch
          %270 = sbr.rel (%p268) target = $region36
        $region35: #{tpu_custom_call.1} parent=23 // pred_region
          _
        $region36: #{tpu_custom_call.1} parent=23 // pred_fallthru
          _
        // Predicated region
        $region37: #{tpu_custom_call.1} parent=23 // pred_check
          %p271 = pneg %p104
        $region38: #{tpu_custom_call.1} parent=23 // pred_check_branch
          %273 = sbr.rel (%p271) target = $region40
        $region39: #{tpu_custom_call.1} parent=23 // pred_region
          %s275 = ssub.s32 64, 64
          %276 = vsyncadd %s264, %s275
          %s277 = smul.addr %s24, 64
          %s278 = scalar_lea.hbm %s2, %s277
          %s280 = sshll.u32 %s267, 4
          %s281 = int_to_ptr.vmem [resolvable:$true] %s280
          %283 = dma.vmem_to_hbm [thread:$0]  %s281, 64, %s278, %s264
        $region40: #{tpu_custom_call.1} parent=23 // pred_fallthru
          _
      $region24: #{tpu_custom_call.1} parent=5 // pred_fallthru
        _
      %p284 = scmp.le.s32.totalorder 2, %s15
      // Predicated region
      $region41: #{tpu_custom_call.1} parent=5 // pred_check
        %p285 = pneg %p284
      $region42: #{tpu_custom_call.1} parent=5 // pred_check_branch
        %287 = sbr.rel (%p285) target = $region44
      $region43: #{tpu_custom_call.1} parent=5 // pred_region
        %s288 = ssub.s32 %s15, 2
        // Predicated region
        $region45: #{tpu_custom_call.1} parent=43 // pred_check
          %p289 = pneg %p84
        $region46: #{tpu_custom_call.1} parent=43 // pred_check_branch
          %291 = sbr.rel (%p289) target = $region48
        $region47: #{tpu_custom_call.1} parent=43 // pred_region
          %p292 = scmp.lt.s32.totalorder %s26, 1
          %s293 = scalar_select %p292, %s26, 1
          %s294 = smul.addr %s293, 4
          %s295 = scalar_lea.vmem %s1, %s294
        $region48: #{tpu_custom_call.1} parent=43 // pred_fallthru
          _
        // Predicated region
        $region49: #{tpu_custom_call.1} parent=43 // pred_check
          %p296 = pneg %p110
        $region50: #{tpu_custom_call.1} parent=43 // pred_check_branch
          %298 = sbr.rel (%p296) target = $region52
        $region51: #{tpu_custom_call.1} parent=43 // pred_region
          %s299 = sand.u32 %s95, 1
          %s300 = scalar_lea.sflag [#allocation4], %s299
          %s301 = sand.u32 %s95, 1
          %s302 = smul.addr %s301, 4
          %s303 = scalar_lea.vmem [#allocation5], %s302
          %304 = dma.done %s300, 64
        $region52: #{tpu_custom_call.1} parent=43 // pred_fallthru
          _
      $region44: #{tpu_custom_call.1} parent=5 // pred_fallthru
        _
    $region6: #{tpu_custom_call.1} parent=1 // loop_footer
      %s19 = sadd.s32 1, %s15
    $region7: #{tpu_custom_call.1} parent=1 // loop_footer_branch
      %14 = sbr.rel target = $region3
    $region8: #{tpu_custom_call.1} parent=1 // loop_exit
      _
    %305 = vsyncpa [#allocation3], 1
    %s306 = scalar_lea.sflag [#allocation3], 1
    %307 = vsyncpa %s306, 1
    %308 = vsyncpa [#allocation4], 1
    %s309 = scalar_lea.sflag [#allocation4], 1
    %310 = vsyncpa %s309, 1

</llo_original>
